<compile_context>
chip_gen: v7x
topology: tpu7x:2x2x1
jax: 0.10.0
libtpu: 0.0.40
codegen_flags: <defaults>
</compile_context>

<pallas_src>
import functools

import jax
import jax.numpy as jnp
from jax import lax
from jax.experimental import pallas as pl
from jax.experimental.pallas import tpu as pltpu


def _tap_shift(x, k, n_adj, length, lane_aligned):
    """Circular tap window: x_k[..., l] = x[..., (l + k - n_adj) % length]."""
    s = (k - n_adj) % length
    if s == 0:
        return x
    if lane_aligned:
        # Lane-aligned extent: XLU lane rotation (vrot), no VMEM materialisation.
        return pltpu.roll(x, shift=(length - s) % length, axis=-1)
    # Small / ragged lane extent (e.g. L=16 demo): static two-slice rotate.
    return jnp.concatenate([x[..., s:], x[..., :s]], axis=-1)


def _circconv_kernel(x_ref, w_ref, b_ref, o_ref, *, n_adj, lane_tile, l_tiles):
    """One (batch, lane-tile) grid step of the circular Conv1d.

    x_ref : (C_in, L)            full spatial extent for this batch element
                                 (resident across the lane-tile grid axis)
    w_ref : (K, C_out, C_in)     weight, tap-major
    b_ref : (C_out, 1)           bias (f32)
    o_ref : (C_out, lane_tile)   output tile
    """
    K = 2 * n_adj + 1
    _, length = x_ref.shape
    lane_aligned = (length % 128 == 0)

    x = x_ref[...]

    acc = None
    for k in range(K):                      # K is small & static -> fully unrolled
        x_k = _tap_shift(x, k, n_adj, length, lane_aligned)
        if l_tiles > 1:
            start = pl.multiple_of(pl.program_id(1) * lane_tile, lane_tile)
            x_k = lax.dynamic_slice_in_dim(x_k, start, lane_tile, axis=1)
        # Shallow per-tap MXU matmul; repeated `acc + dot` lets v7x accumulate
        # in the MRB (v5e/v6e pop the MRF and add on the VPU, cheap at K taps).
        part = jnp.dot(w_ref[k], x_k, preferred_element_type=jnp.float32)
        acc = part if acc is None else acc + part

    o_ref[...] = (acc + b_ref[...]).astype(o_ref.dtype)


@functools.partial(jax.jit, static_argnames=("n_adj", "mxu_dtype"))
def circ_conv(x, weight, bias, n_adj=2, mxu_dtype=None):
    """Circular Conv1d matching CircConv.forward (the `adj` arg is unused there).

    x: (B, C_in, L); weight: (C_out, C_in, K); bias: (C_out,) -> (B, C_out, L).
    Requires L >= n_adj (single-wrap circular padding, same as torch's pad).
    """
    B, C_in, L = x.shape
    C_out, C_in_w, K = weight.shape
    assert C_in_w == C_in and K == 2 * n_adj + 1
    assert L >= n_adj, "circular padding requires L >= n_adj"

    # Lane-dense L tiling: 128-multiple tiles (unmasked vst) when L allows,
    # kept modest so the per-step working set also fits v7x's 64 MiB VMEM;
    # otherwise a single full-L tile (small / ragged regime).
    lane_tile = L
    if L % 128 == 0:
        for t in (512, 256, 128):
            if L % t == 0 and L // t >= 2:
                lane_tile = t
                break
    l_tiles = L // lane_tile

    out_dtype = x.dtype
    w_t = jnp.transpose(weight, (2, 0, 1))          # (K, C_out, C_in) - tiny
    b2 = bias.astype(jnp.float32).reshape(C_out, 1)
    if mxu_dtype is not None:                       # bf16 MXU inputs, f32 accum
        x = x.astype(mxu_dtype)
        w_t = w_t.astype(mxu_dtype)

    kernel = functools.partial(_circconv_kernel, n_adj=n_adj,
                               lane_tile=lane_tile, l_tiles=l_tiles)

    return pl.pallas_call(
        kernel,
        out_shape=jax.ShapeDtypeStruct((B, C_out, L), out_dtype),
        grid_spec=pltpu.PrefetchScalarGridSpec(
            num_scalar_prefetch=0,
            grid=(B, l_tiles),
            in_specs=[
                # x: one batch element, full L (resident across the L-tile axis).
                pl.BlockSpec((None, C_in, L), lambda b, lt: (b, 0, 0)),
                # weight / bias: whole (tiny) arrays, resident.
                pl.BlockSpec((K, C_out, C_in), lambda b, lt: (0, 0, 0)),
                pl.BlockSpec((C_out, 1), lambda b, lt: (0, 0)),
            ],
            out_specs=pl.BlockSpec((None, C_out, lane_tile),
                                   lambda b, lt: (b, 0, lt)),
        ),
        compiler_params=pltpu.CompilerParams(
            dimension_semantics=("parallel", "parallel"),
        ),
    )(x, w_t, b2)


def _reference(x, weight, bias, n_adj=2):
    """Pure-JAX reference mirroring the PyTorch forward."""
    x_pad = jnp.concatenate([x[..., -n_adj:], x, x[..., :n_adj]], axis=2)
    out = lax.conv_general_dilated(
        x_pad, weight, window_strides=(1,), padding="VALID",
        dimension_numbers=("NCH", "OIH", "NCH"),
    )
    return out + bias.reshape(1, -1, 1)


if __name__ == "__main__":
    key = jax.random.PRNGKey(0)
    k1, k2, k3 = jax.random.split(key, 3)

    B, C_in, L = 2, 4, 16
    n_adj = 2
    C_out = C_in                     # out_state_dim defaults to state_dim
    K = 2 * n_adj + 1

    # Deterministic synthetic parameters (shapes match nn.Conv1d(C_in, C_out, K)).
    x = jax.random.normal(k1, (B, C_in, L), dtype=jnp.float32)
    fan_in = C_in * K
    bound = 1.0 / (fan_in ** 0.5)
    weight = jax.random.uniform(k2, (C_out, C_in, K), jnp.float32, -bound, bound)
    bias = jax.random.uniform(k3, (C_out,), jnp.float32, -bound, bound)

    out = jax.block_until_ready(circ_conv(x, weight, bias, n_adj=n_adj))

    ref = _reference(x, weight, bias, n_adj=n_adj)
    assert out.shape == (B, C_out, L), out.shape
    assert jnp.allclose(out, ref, atol=1e-5, rtol=1e-5), "mismatch vs reference"

    print("KERNEL_OK")
</pallas_src>

<mosaic_0001>
module attributes {stable_mosaic.version = 11 : i64} {
  func.func @_circconv_kernel(%arg0: i32, %arg1: i32, %arg2: memref<1x4x16xf32, #tpu.memory_space<vmem>>, %arg3: memref<5x4x4xf32, #tpu.memory_space<vmem>>, %arg4: memref<4x1xf32, #tpu.memory_space<vmem>>, %arg5: memref<1x4x16xf32, #tpu.memory_space<vmem>>) attributes {dimension_semantics = [#tpu.dimension_semantics<parallel>, #tpu.dimension_semantics<parallel>], iteration_bounds = array<i64: 2, 1>, scalar_prefetch = 0 : i64, scratch_operands = 0 : i64, tpu.core_type = #tpu.core_type<tc>, window_params = [{transform_indices = @transform_0, window_bounds = array<i64: 1, 4, 16>}, {pipeline_mode = #tpu.pipeline_mode<synchronous>, transform_indices = @transform_1, window_bounds = array<i64: 5, 4, 4>}, {pipeline_mode = #tpu.pipeline_mode<synchronous>, transform_indices = @transform_2, window_bounds = array<i64: 4, 1>}, {transform_indices = @transform_3, window_bounds = array<i64: 1, 4, 16>}]} {
    %c0 = arith.constant 0 : index
    %c0_0 = arith.constant 0 : index
    %c0_1 = arith.constant 0 : index
    %0 = vector.load %arg2[%c0, %c0_0, %c0_1] : memref<1x4x16xf32, #tpu.memory_space<vmem>>, vector<1x4x16xf32>
    %1 = vector.shape_cast %0 : vector<1x4x16xf32> to vector<4x16xf32>
    %2 = vector.extract_strided_slice %1 {offsets = [0, 14], sizes = [4, 2], strides = [1, 1]} : vector<4x16xf32> to vector<4x2xf32>
    %3 = vector.extract_strided_slice %1 {offsets = [0, 0], sizes = [4, 14], strides = [1, 1]} : vector<4x16xf32> to vector<4x14xf32>
    %4 = tpu.concatenate %2, %3 in 1 : vector<4x2xf32>, vector<4x14xf32> -> vector<4x16xf32>
    %c0_2 = arith.constant 0 : index
    %c0_3 = arith.constant 0 : index
    %c0_4 = arith.constant 0 : index
    %5 = vector.load %arg3[%c0_2, %c0_3, %c0_4] : memref<5x4x4xf32, #tpu.memory_space<vmem>>, vector<1x4x4xf32>
    %6 = vector.shape_cast %5 : vector<1x4x4xf32> to vector<4x4xf32>
    %cst = arith.constant dense<0.000000e+00> : vector<4x16xf32>
    %7 = tpu.matmul %6, %4, %cst {dimension_numbers = #tpu.dot_dimension_numbers<[1], [0], [0], [1], [0, 0, 1, 1], [], []>} : vector<4x4xf32>, vector<4x16xf32>, vector<4x16xf32> -> vector<4x16xf32>
    %8 = vector.extract_strided_slice %1 {offsets = [0, 15], sizes = [4, 1], strides = [1, 1]} : vector<4x16xf32> to vector<4x1xf32>
    %9 = vector.extract_strided_slice %1 {offsets = [0, 0], sizes = [4, 15], strides = [1, 1]} : vector<4x16xf32> to vector<4x15xf32>
    %10 = tpu.concatenate %8, %9 in 1 : vector<4x1xf32>, vector<4x15xf32> -> vector<4x16xf32>
    %c1 = arith.constant 1 : index
    %c0_5 = arith.constant 0 : index
    %c0_6 = arith.constant 0 : index
    %11 = vector.load %arg3[%c1, %c0_5, %c0_6] : memref<5x4x4xf32, #tpu.memory_space<vmem>>, vector<1x4x4xf32>
    %12 = vector.shape_cast %11 : vector<1x4x4xf32> to vector<4x4xf32>
    %cst_7 = arith.constant dense<0.000000e+00> : vector<4x16xf32>
    %13 = tpu.matmul %12, %10, %cst_7 {dimension_numbers = #tpu.dot_dimension_numbers<[1], [0], [0], [1], [0, 0, 1, 1], [], []>} : vector<4x4xf32>, vector<4x16xf32>, vector<4x16xf32> -> vector<4x16xf32>
    %14 = arith.addf %7, %13 : vector<4x16xf32>
    %c2 = arith.constant 2 : index
    %c0_8 = arith.constant 0 : index
    %c0_9 = arith.constant 0 : index
    %15 = vector.load %arg3[%c2, %c0_8, %c0_9] : memref<5x4x4xf32, #tpu.memory_space<vmem>>, vector<1x4x4xf32>
    %16 = vector.shape_cast %15 : vector<1x4x4xf32> to vector<4x4xf32>
    %cst_10 = arith.constant dense<0.000000e+00> : vector<4x16xf32>
    %17 = tpu.matmul %16, %1, %cst_10 {dimension_numbers = #tpu.dot_dimension_numbers<[1], [0], [0], [1], [0, 0, 1, 1], [], []>} : vector<4x4xf32>, vector<4x16xf32>, vector<4x16xf32> -> vector<4x16xf32>
    %18 = arith.addf %14, %17 : vector<4x16xf32>
    %19 = vector.extract_strided_slice %1 {offsets = [0, 1], sizes = [4, 15], strides = [1, 1]} : vector<4x16xf32> to vector<4x15xf32>
    %20 = vector.extract_strided_slice %1 {offsets = [0, 0], sizes = [4, 1], strides = [1, 1]} : vector<4x16xf32> to vector<4x1xf32>
    %21 = tpu.concatenate %19, %20 in 1 : vector<4x15xf32>, vector<4x1xf32> -> vector<4x16xf32>
    %c3 = arith.constant 3 : index
    %c0_11 = arith.constant 0 : index
    %c0_12 = arith.constant 0 : index
    %22 = vector.load %arg3[%c3, %c0_11, %c0_12] : memref<5x4x4xf32, #tpu.memory_space<vmem>>, vector<1x4x4xf32>
    %23 = vector.shape_cast %22 : vector<1x4x4xf32> to vector<4x4xf32>
    %cst_13 = arith.constant dense<0.000000e+00> : vector<4x16xf32>
    %24 = tpu.matmul %23, %21, %cst_13 {dimension_numbers = #tpu.dot_dimension_numbers<[1], [0], [0], [1], [0, 0, 1, 1], [], []>} : vector<4x4xf32>, vector<4x16xf32>, vector<4x16xf32> -> vector<4x16xf32>
    %25 = arith.addf %18, %24 : vector<4x16xf32>
    %26 = vector.extract_strided_slice %1 {offsets = [0, 2], sizes = [4, 14], strides = [1, 1]} : vector<4x16xf32> to vector<4x14xf32>
    %27 = vector.extract_strided_slice %1 {offsets = [0, 0], sizes = [4, 2], strides = [1, 1]} : vector<4x16xf32> to vector<4x2xf32>
    %28 = tpu.concatenate %26, %27 in 1 : vector<4x14xf32>, vector<4x2xf32> -> vector<4x16xf32>
    %c4 = arith.constant 4 : index
    %c0_14 = arith.constant 0 : index
    %c0_15 = arith.constant 0 : index
    %29 = vector.load %arg3[%c4, %c0_14, %c0_15] : memref<5x4x4xf32, #tpu.memory_space<vmem>>, vector<1x4x4xf32>
    %30 = vector.shape_cast %29 : vector<1x4x4xf32> to vector<4x4xf32>
    %cst_16 = arith.constant dense<0.000000e+00> : vector<4x16xf32>
    %31 = tpu.matmul %30, %28, %cst_16 {dimension_numbers = #tpu.dot_dimension_numbers<[1], [0], [0], [1], [0, 0, 1, 1], [], []>} : vector<4x4xf32>, vector<4x16xf32>, vector<4x16xf32> -> vector<4x16xf32>
    %32 = arith.addf %25, %31 : vector<4x16xf32>
    %c0_17 = arith.constant 0 : index
    %c0_18 = arith.constant 0 : index
    %33 = vector.load %arg4[%c0_17, %c0_18] : memref<4x1xf32, #tpu.memory_space<vmem>>, vector<4x1xf32>
    %34 = vector.broadcast %33 : vector<4x1xf32> to vector<4x16xf32>
    %35 = arith.addf %32, %34 : vector<4x16xf32>
    %c0_19 = arith.constant 0 : index
    %c0_20 = arith.constant 0 : index
    %c0_21 = arith.constant 0 : index
    %36 = vector.load %arg5[%c0_19, %c0_20, %c0_21] : memref<1x4x16xf32, #tpu.memory_space<vmem>>, vector<1x4x16xf32>
    %37 = vector.shape_cast %36 : vector<1x4x16xf32> to vector<4x16xf32>
    %38 = vector.shape_cast %35 : vector<4x16xf32> to vector<1x4x16xf32>
    tpu.vector_store %arg5[%c0_19, %c0_20, %c0_21], %38 {strides = array<i32>} : memref<1x4x16xf32, #tpu.memory_space<vmem>>, vector<1x4x16xf32>,
    return
  }
  func.func @transform_0(%arg0: i32, %arg1: i32) -> (i32, i32, i32) {
    %c0_i32 = arith.constant 0 : i32
    %c0_i32_0 = arith.constant 0 : i32
    %c0_i32_1 = arith.constant 0 : i32
    return %arg0, %c0_i32, %c0_i32_0 : i32, i32, i32
  }
  func.func @transform_1(%arg0: i32, %arg1: i32) -> (i32, i32, i32) {
    %c0_i32 = arith.constant 0 : i32
    %c0_i32_0 = arith.constant 0 : i32
    %c0_i32_1 = arith.constant 0 : i32
    %c0_i32_2 = arith.constant 0 : i32
    return %c0_i32, %c0_i32_0, %c0_i32_1 : i32, i32, i32
  }
  func.func @transform_2(%arg0: i32, %arg1: i32) -> (i32, i32) {
    %c0_i32 = arith.constant 0 : i32
    %c0_i32_0 = arith.constant 0 : i32
    %c0_i32_1 = arith.constant 0 : i32
    return %c0_i32, %c0_i32_0 : i32, i32
  }
  func.func @transform_3(%arg0: i32, %arg1: i32) -> (i32, i32, i32) {
    %c0_i32 = arith.constant 0 : i32
    %c0_i32_0 = arith.constant 0 : i32
    return %arg0, %c0_i32, %arg1 : i32, i32, i32
  }
}

</mosaic_0001>

<llo_original>
// kernel: circ_conv.1
$region0: #{circ_conv.1}
  #allocation0 [shape = 'u32[]', space=smem, size = 0x4, offset = 0x4, fixed_abs, tag = 'smem constant byte address 0x4 - core index']
  #allocation1 [shape = 'u32[144,128]{1,0:T(1,128)}', space=vmem, size = 0x12000, scoped, tag = 'internal scratch']
  %s0 = inlined_call_operand.vmem [shape: f32[2,4,16], index: 0, kind: input, shape index: {}]
  %s1 = inlined_call_operand.vmem [shape: f32[5,4,4], index: 1, kind: input, shape index: {}]
  %s2 = inlined_call_operand.vmem [shape: f32[4,1], index: 2, kind: input, shape index: {}]
  %s3 = inlined_call_operand.hbm [shape: f32[2,4,16], index: 3, kind: output, shape index: {}]
  %s4 = sld [smem:[#allocation0]]
  $region45: #{circ_conv.1} parent=0
    _
  %s6 = ssub.s32 1, %s4
  %s7 = scalar_select 0, %s6, %s4
  $region1: #{circ_conv.1} parent=0
    #allocation2 [shape = 'u8[4096]{0}', space=vmem, size = 0x1000, scoped, tag = 'output window, operand 0']
    #allocation3 [shape = 's32[2]{0}', space=sflag, size = 0x8, scoped, tag = 'scoped memory for circ_conv.1']
    %8 = vsyncpa [#allocation3], 0
    %s9 = scalar_lea.sflag [#allocation3], 1
    %10 = vsyncpa %s9, 0
    loop: start=0, step=1, limit=4
    $region2: #{circ_conv.1} parent=1 // loop_pre_header
      _
    $region3: #{circ_conv.1} parent=1 // loop_header
      %s12 = sphi 0, %s16
      %p13 = scmp.ge.s32.totalorder %s12, 4
      %s19 = sphi 0, %s31
      %s20 = sphi 0, %s27
      %s21 = sphi 0, %s19
      %s22 = sphi 0, %s20
      %s23 = sphi 0, %s21
      %s24 = sphi 0, %s22
      %s34 = sphi 0, %s36
      %s37 = sphi 0, %s34
      %s38 = sphi 0, %s37
      %s54 = sphi 0, %s38
      %s58 = sphi 0, %s58
      %s60 = sphi 0, %s58
      %s61 = sphi 0, %s60
      %s75 = sphi 0, %s61
      %s79 = sphi 0, %s79
      %s81 = sphi 0, %s79
      %s82 = sphi 0, %s81
      %s96 = sphi 0, %s82
      %s104 = sphi 0, %s106
      %s107 = sphi 0, %s104
      %s108 = sphi 0, %s107
      %s124 = sphi 0, %s108
    $region4: #{circ_conv.1} parent=1 // loop_header_branch
      %15 = sbr.rel (%p13) target = $region8
    $region5: #{circ_conv.1} parent=1 // loop_body
      %s17 = ssub.s32 %s12, 1
      %s18 = ssub.s32 %s12, 2
      %s25 = sadd.s32 1, %s20
      %p26 = scmp.ge.s32.totalorder %s25, 1
      %s27 = scalar_select %p26, 0, %s25
      %s28 = sadd.s32 1, %s19
      %s29 = scalar_select %p26, %s28, %s19
      %p30 = scmp.ge.s32.totalorder %s29, 2
      %s31 = scalar_select %p30, 0, %s29
      %s32 = ssub.s32 %s19, %s31
      %p33 = scmp.eq.s32.totalorder %s32, 0
      %s35 = sadd.s32 %s34, 1
      %s36 = scalar_select %p33, %s34, %s35
      %p39 = pneg %p33
      %p40 = scmp.eq.s32.totalorder %s12, 1
      %p41 = por %p39, %p40
      %p42 = scmp.ne.s32.totalorder %s34, %s37
      %p43 = scmp.eq.s32.totalorder %s12, 0
      %p44 = por %p42, %p43
      %p45 = scmp.ne.s32.totalorder %s34, %s37
      %p46 = scmp.eq.s32.totalorder %s17, 1
      %p47 = por %p45, %p46
      %p48 = scmp.ne.s32.totalorder %s37, %s38
      %p49 = scmp.eq.s32.totalorder %s17, 0
      %p50 = por %p48, %p49
      %p51 = scmp.ne.s32.totalorder %s37, %s38
      %p52 = scmp.eq.s32.totalorder %s18, 1
      %p53 = por %p51, %p52
      %p55 = scmp.ne.s32.totalorder %s38, %s54
      %p56 = scmp.eq.s32.totalorder %s18, 0
      %p57 = por %p55, %p56
      %s59 = sadd.s32 %s58, 1
      %p62 = scmp.eq.s32.totalorder %s12, 1
      %p63 = scmp.ne.s32.totalorder %s58, %s60
      %p64 = scmp.eq.s32.totalorder %s12, 0
      %p65 = por %p63, %p64
      %p66 = scmp.ne.s32.totalorder %s58, %s60
      %p67 = scmp.eq.s32.totalorder %s17, 1
      %p68 = por %p66, %p67
      %p69 = scmp.ne.s32.totalorder %s60, %s61
      %p70 = scmp.eq.s32.totalorder %s17, 0
      %p71 = por %p69, %p70
      %p72 = scmp.ne.s32.totalorder %s60, %s61
      %p73 = scmp.eq.s32.totalorder %s18, 1
      %p74 = por %p72, %p73
      %p76 = scmp.ne.s32.totalorder %s61, %s75
      %p77 = scmp.eq.s32.totalorder %s18, 0
      %p78 = por %p76, %p77
      %s80 = sadd.s32 %s79, 1
      %p83 = scmp.eq.s32.totalorder %s12, 1
      %p84 = scmp.ne.s32.totalorder %s79, %s81
      %p85 = scmp.eq.s32.totalorder %s12, 0
      %p86 = por %p84, %p85
      %p87 = scmp.ne.s32.totalorder %s79, %s81
      %p88 = scmp.eq.s32.totalorder %s17, 1
      %p89 = por %p87, %p88
      %p90 = scmp.ne.s32.totalorder %s81, %s82
      %p91 = scmp.eq.s32.totalorder %s17, 0
      %p92 = por %p90, %p91
      %p93 = scmp.ne.s32.totalorder %s81, %s82
      %p94 = scmp.eq.s32.totalorder %s18, 1
      %p95 = por %p93, %p94
      %p97 = scmp.ne.s32.totalorder %s82, %s96
      %p98 = scmp.eq.s32.totalorder %s18, 0
      %p99 = por %p97, %p98
      %s100 = ssub.s32 %s19, %s31
      %s101 = ssub.s32 %s20, %s27
      %s102 = sor.u32 %s100, %s101
      %p103 = scmp.eq.s32.totalorder %s102, 0
      %s105 = sadd.s32 %s104, 1
      %s106 = scalar_select %p103, %s104, %s105
      %p109 = pneg %p103
      %p110 = scmp.eq.s32.totalorder %s12, 1
      %p111 = por %p109, %p110
      %p112 = scmp.ne.s32.totalorder %s104, %s107
      %p113 = scmp.eq.s32.totalorder %s12, 0
      %p114 = por %p112, %p113
      %p115 = scmp.ne.s32.totalorder %s104, %s107
      %p116 = scmp.eq.s32.totalorder %s17, 1
      %p117 = por %p115, %p116
      %p118 = scmp.ne.s32.totalorder %s107, %s108
      %p119 = scmp.eq.s32.totalorder %s17, 0
      %p120 = por %p118, %p119
      %p121 = scmp.ne.s32.totalorder %s107, %s108
      %p122 = scmp.eq.s32.totalorder %s18, 1
      %p123 = por %p121, %p122
      %p125 = scmp.ne.s32.totalorder %s108, %s124
      %p126 = scmp.eq.s32.totalorder %s18, 0
      %p127 = por %p125, %p126
      %p128 = scmp.le.s32.totalorder 1, %s12
      %p129 = scmp.lt.s32.totalorder %s12, 3
      %p130 = pnand %p128, %p129
      %p131 = pneg %p130
      // Predicated region
      $region9: #{circ_conv.1} parent=5 // pred_check
        _
      $region10: #{circ_conv.1} parent=5 // pred_check_branch
        %133 = sbr.rel (%p130) target = $region12
      $region11: #{circ_conv.1} parent=5 // pred_region
        %s134 = ssub.s32 %s12, 1
        // Predicated region
        $region13: #{circ_conv.1} parent=11 // pred_check
          %p135 = pneg %p71
        $region14: #{circ_conv.1} parent=11 // pred_check_branch
          %137 = sbr.rel (%p135) target = $region16
        $region15: #{circ_conv.1} parent=11 // pred_region
          _
        $region16: #{circ_conv.1} parent=11 // pred_fallthru
          _
        // Predicated region
        $region17: #{circ_conv.1} parent=11 // pred_check
          %p138 = pneg %p92
        $region18: #{circ_conv.1} parent=11 // pred_check_branch
          %140 = sbr.rel (%p138) target = $region20
        $region19: #{circ_conv.1} parent=11 // pred_region
          _
        $region20: #{circ_conv.1} parent=11 // pred_fallthru
          _
      $region12: #{circ_conv.1} parent=5 // pred_fallthru
        _
      %p141 = scmp.lt.s32.totalorder %s12, 2
      // Predicated region
      $region21: #{circ_conv.1} parent=5 // pred_check
        %p142 = pneg %p141
      $region22: #{circ_conv.1} parent=5 // pred_check_branch
        %144 = sbr.rel (%p142) target = $region24
      $region23: #{circ_conv.1} parent=5 // pred_region
        // Predicated region
        $region25: #{circ_conv.1} parent=23 // pred_check
          %p145 = pneg %p44
        $region26: #{circ_conv.1} parent=23 // pred_check_branch
          %147 = sbr.rel (%p145) target = $region28
        $region27: #{circ_conv.1} parent=23 // pred_region
          %p148 = scmp.lt.s32.totalorder %s19, 1
          %s149 = scalar_select %p148, %s19, 1
          %s150 = smul.addr %s149, 4
          %s151 = scalar_lea.vmem %s0, %s150
        $region28: #{circ_conv.1} parent=23 // pred_fallthru
          _
      $region24: #{circ_conv.1} parent=5 // pred_fallthru
        _
      %p152 = scmp.le.s32.totalorder 1, %s12
      %p153 = scmp.lt.s32.totalorder %s12, 3
      %p154 = pnand %p152, %p153
      %p155 = pneg %p154
      // Predicated region
      $region29: #{circ_conv.1} parent=5 // pred_check
        _
      $region30: #{circ_conv.1} parent=5 // pred_check_branch
        %157 = sbr.rel (%p154) target = $region32
      $region31: #{circ_conv.1} parent=5 // pred_region
        %s158 = ssub.s32 %s12, 1
        %p159 = scmp.lt.s32.totalorder %s21, 1
        %s160 = scalar_select %p159, %s21, 1
        %s161 = smul.addr %s160, 4
        %s162 = scalar_lea.vmem %s0, %s161
        %p163 = pneg %p50
        %p164 = pneg %p47
        %p165 = pneg %p71
        %p166 = pneg %p68
        %p167 = pneg %p92
        %p168 = pneg %p89
        %p169 = pneg %p120
        %p170 = pneg %p117
        %s171 = sand.u32 %s107, 1
        %s172 = scalar_lea.sflag [#allocation3], %s171
        %s173 = sand.u32 %s107, 1
        %s174 = smul.addr %s173, 4
        %s175 = scalar_lea.vmem [#allocation2], %s174
        %p176 = scmp.lt.s32.totalorder %s21, 1
        %s177 = scalar_select %p176, %s21, 1
        %s178 = smul.addr %s177, 4
        %s179 = scalar_lea.vmem %s0, %s178
        %v180 = vld [vmem:[%s179] sm:$0xf]
        %182 = vrot.lane.b32.xlu0 %v180, 114
        %v183 = vpop.permute.xlu0 %182
        %185 = vrot.lane.b32.xlu0 %v180, 2
        %v186 = vpop.permute.xlu0 %185
        %vm188 = vcmask 15360
        %v189 = vsel %vm188, %v183, %v186
        %v190 = vld [vmem:[%s1] sm:$0xf]
        %191 = vrot.lane.b32.xlu0 %v180, 113
        %v192 = vpop.permute.xlu0 %191
        %194 = vrot.lane.b32.xlu0 %v180, 1
        %v195 = vpop.permute.xlu0 %194
        %vm197 = vcmask 7168
        %v198 = vsel %vm197, %v192, %v195
        %s199 = scalar_lea.vmem %s1, 4
        %v200 = vld [vmem:[%s199] sm:$0xf]
        %vm201 = vcmask 31744
        %v203 = vsel %vm201, %v200, 0
        %vm205 = vcmask 1043456
        %v207 = vsel %vm205, %v198, 0
        %209 = vmatprep.subr.mxu0 0.0
        %210 = vmatpush1.msra.mxu0 %v207
        %211 = vmatprep.subr.mxu0 0.0
        %212 = vmatpush1.msra.mxu0 0.0
        %213 = vmatprep.subr.mxu0 0.0
        %214 = vmatpush1.msra.mxu0 0.0
        %215 = vmatprep.subr.mxu0 0.0
        %216 = vmatpush1.msra.mxu0 0.0
        %217 = vmatprep.subr.mxu0 0.0
        %218 = vmatpush1.msra.mxu0 0.0
        %219 = vmatprep.subr.mxu0 0.0
        %220 = vmatpush1.msra.mxu0 0.0
        %221 = vmatprep.subr.mxu0 0.0
        %222 = vmatpush1.msra.mxu0 0.0
        %223 = vmatprep.subr.mxu0 0.0
        %224 = vmatpush1.msra.mxu0 0.0
        %225 = vmatprep.subr.mxu0 0.0
        %226 = vmatpush1.msra.mxu0 0.0
        %227 = vmatprep.subr.mxu0 0.0
        %228 = vmatpush1.msra.mxu0 0.0
        %229 = vmatprep.subr.mxu0 0.0
        %230 = vmatpush1.msra.mxu0 0.0
        %231 = vmatprep.subr.mxu0 0.0
        %232 = vmatpush1.msra.mxu0 0.0
        %233 = vmatprep.subr.mxu0 0.0
        %234 = vmatpush1.msra.mxu0 0.0
        %235 = vmatprep.subr.mxu0 0.0
        %236 = vmatpush1.msra.mxu0 0.0
        %237 = vmatprep.subr.mxu0 0.0
        %238 = vmatpush1.msra.mxu0 0.0
        %239 = vmatprep.subr.mxu0 0.0
        %240 = vmatpush1.msra.mxu0 0.0
        %241 = vmatprep.subr.mxu0 0.0
        %242 = vmatpush1.msra.mxu0 0.0
        %243 = vmatprep.subr.mxu0 0.0
        %244 = vmatpush1.msra.mxu0 0.0
        %245 = vmatprep.subr.mxu0 0.0
        %246 = vmatpush1.msra.mxu0 0.0
        %247 = vmatprep.subr.mxu0 0.0
        %248 = vmatpush1.msra.mxu0 0.0
        %249 = vmatprep.subr.mxu0 0.0
        %250 = vmatpush1.msra.mxu0 0.0
        %251 = vmatprep.subr.mxu0 0.0
        %252 = vmatpush1.msra.mxu0 0.0
        %253 = vmatprep.subr.mxu0 0.0
        %254 = vmatpush1.msra.mxu0 0.0
        %255 = vmatprep.subr.mxu0 0.0
        %256 = vmatpush1.msra.mxu0 0.0
        %257 = vmatprep.subr.mxu0 0.0
        %258 = vmatpush1.msra.mxu0 0.0
        %259 = vmatprep.subr.mxu0 0.0
        %260 = vmatpush1.msra.mxu0 0.0
        %261 = vmatprep.subr.mxu0 0.0
        %262 = vmatpush1.msra.mxu0 0.0
        %263 = vmatprep.subr.mxu0 0.0
        %264 = vmatpush1.msra.mxu0 0.0
        %265 = vmatprep.subr.mxu0 0.0
        %266 = vmatpush1.msra.mxu0 0.0
        %267 = vmatprep.subr.mxu0 0.0
        %268 = vmatpush1.msra.mxu0 0.0
        %269 = vmatprep.subr.mxu0 0.0
        %270 = vmatpush1.msra.mxu0 0.0
        %271 = vmatprep.subr.mxu0 0.0
        %272 = vmatpush1.msra.mxu0 0.0
        %273 = vmatprep.mubr.f32.mxu0 0.0
        %274 = vmatmul.mubr.f32.gmra.mrb[0].mxu0 %v203
        %v275 = vpop.f32.mrb[0].mxu0
        %v276 = vadd.f32 0.0, %v275
        %v277 = vpop.f32.mrb[0].mxu0
        %278 = vdwg.mxu0
        %v280 = vsel %vm201, %v190, 0
        %v283 = vsel %vm205, %v189, 0
        %285 = vmatprep.subr.mxu0 0.0
        %286 = vmatpush1.msra.mxu0 %v283
        %287 = vmatprep.subr.mxu0 0.0
        %288 = vmatpush1.msra.mxu0 0.0
        %289 = vmatprep.subr.mxu0 0.0
        %290 = vmatpush1.msra.mxu0 0.0
        %291 = vmatprep.subr.mxu0 0.0
        %292 = vmatpush1.msra.mxu0 0.0
        %293 = vmatprep.subr.mxu0 0.0
        %294 = vmatpush1.msra.mxu0 0.0
        %295 = vmatprep.subr.mxu0 0.0
        %296 = vmatpush1.msra.mxu0 0.0
        %297 = vmatprep.subr.mxu0 0.0
        %298 = vmatpush1.msra.mxu0 0.0
        %299 = vmatprep.subr.mxu0 0.0
        %300 = vmatpush1.msra.mxu0 0.0
        %301 = vmatprep.subr.mxu0 0.0
        %302 = vmatpush1.msra.mxu0 0.0
        %303 = vmatprep.subr.mxu0 0.0
        %304 = vmatpush1.msra.mxu0 0.0
        %305 = vmatprep.subr.mxu0 0.0
        %306 = vmatpush1.msra.mxu0 0.0
        %307 = vmatprep.subr.mxu0 0.0
        %308 = vmatpush1.msra.mxu0 0.0
        %309 = vmatprep.subr.mxu0 0.0
        %310 = vmatpush1.msra.mxu0 0.0
        %311 = vmatprep.subr.mxu0 0.0
        %312 = vmatpush1.msra.mxu0 0.0
        %313 = vmatprep.subr.mxu0 0.0
        %314 = vmatpush1.msra.mxu0 0.0
        %315 = vmatprep.subr.mxu0 0.0
        %316 = vmatpush1.msra.mxu0 0.0
        %317 = vmatprep.subr.mxu0 0.0
        %318 = vmatpush1.msra.mxu0 0.0
        %319 = vmatprep.subr.mxu0 0.0
        %320 = vmatpush1.msra.mxu0 0.0
        %321 = vmatprep.subr.mxu0 0.0
        %322 = vmatpush1.msra.mxu0 0.0
        %323 = vmatprep.subr.mxu0 0.0
        %324 = vmatpush1.msra.mxu0 0.0
        %325 = vmatprep.subr.mxu0 0.0
        %326 = vmatpush1.msra.mxu0 0.0
        %327 = vmatprep.subr.mxu0 0.0
        %328 = vmatpush1.msra.mxu0 0.0
        %329 = vmatprep.subr.mxu0 0.0
        %330 = vmatpush1.msra.mxu0 0.0
        %331 = vmatprep.subr.mxu0 0.0
        %332 = vmatpush1.msra.mxu0 0.0
        %333 = vmatprep.subr.mxu0 0.0
        %334 = vmatpush1.msra.mxu0 0.0
        %335 = vmatprep.subr.mxu0 0.0
        %336 = vmatpush1.msra.mxu0 0.0
        %337 = vmatprep.subr.mxu0 0.0
        %338 = vmatpush1.msra.mxu0 0.0
        %339 = vmatprep.subr.mxu0 0.0
        %340 = vmatpush1.msra.mxu0 0.0
        %341 = vmatprep.subr.mxu0 0.0
        %342 = vmatpush1.msra.mxu0 0.0
        %343 = vmatprep.subr.mxu0 0.0
        %344 = vmatpush1.msra.mxu0 0.0
        %345 = vmatprep.subr.mxu0 0.0
        %346 = vmatpush1.msra.mxu0 0.0
        %347 = vmatprep.subr.mxu0 0.0
        %348 = vmatpush1.msra.mxu0 0.0
        %349 = vmatprep.mubr.f32.mxu0 0.0
        %350 = vmatmul.mubr.f32.gmra.mrb[0].mxu0 %v280
        %v351 = vpop.f32.mrb[0].mxu0
        %v352 = vadd.f32 %v276, %v351
        %v353 = vpop.f32.mrb[0].mxu0
        %354 = vdwg.mxu0
        %s355 = scalar_lea.vmem %s1, 8
        %v356 = vld [vmem:[%s355] sm:$0xf]
        %v358 = vsel %vm201, %v356, 0
        %v360 = vsel %vm205, %v180, 0
        %362 = vmatprep.subr.mxu0 0.0
        %363 = vmatpush1.msra.mxu0 %v360
        %364 = vmatprep.subr.mxu0 0.0
        %365 = vmatpush1.msra.mxu0 0.0
        %366 = vmatprep.subr.mxu0 0.0
        %367 = vmatpush1.msra.mxu0 0.0
        %368 = vmatprep.subr.mxu0 0.0
        %369 = vmatpush1.msra.mxu0 0.0
        %370 = vmatprep.subr.mxu0 0.0
        %371 = vmatpush1.msra.mxu0 0.0
        %372 = vmatprep.subr.mxu0 0.0
        %373 = vmatpush1.msra.mxu0 0.0
        %374 = vmatprep.subr.mxu0 0.0
        %375 = vmatpush1.msra.mxu0 0.0
        %376 = vmatprep.subr.mxu0 0.0
        %377 = vmatpush1.msra.mxu0 0.0
        %378 = vmatprep.subr.mxu0 0.0
        %379 = vmatpush1.msra.mxu0 0.0
        %380 = vmatprep.subr.mxu0 0.0
        %381 = vmatpush1.msra.mxu0 0.0
        %382 = vmatprep.subr.mxu0 0.0
        %383 = vmatpush1.msra.mxu0 0.0
        %384 = vmatprep.subr.mxu0 0.0
        %385 = vmatpush1.msra.mxu0 0.0
        %386 = vmatprep.subr.mxu0 0.0
        %387 = vmatpush1.msra.mxu0 0.0
        %388 = vmatprep.subr.mxu0 0.0
        %389 = vmatpush1.msra.mxu0 0.0
        %390 = vmatprep.subr.mxu0 0.0
        %391 = vmatpush1.msra.mxu0 0.0
        %392 = vmatprep.subr.mxu0 0.0
        %393 = vmatpush1.msra.mxu0 0.0
        %394 = vmatprep.subr.mxu0 0.0
        %395 = vmatpush1.msra.mxu0 0.0
        %396 = vmatprep.subr.mxu0 0.0
        %397 = vmatpush1.msra.mxu0 0.0
        %398 = vmatprep.subr.mxu0 0.0
        %399 = vmatpush1.msra.mxu0 0.0
        %400 = vmatprep.subr.mxu0 0.0
        %401 = vmatpush1.msra.mxu0 0.0
        %402 = vmatprep.subr.mxu0 0.0
        %403 = vmatpush1.msra.mxu0 0.0
        %404 = vmatprep.subr.mxu0 0.0
        %405 = vmatpush1.msra.mxu0 0.0
        %406 = vmatprep.subr.mxu0 0.0
        %407 = vmatpush1.msra.mxu0 0.0
        %408 = vmatprep.subr.mxu0 0.0
        %409 = vmatpush1.msra.mxu0 0.0
        %410 = vmatprep.subr.mxu0 0.0
        %411 = vmatpush1.msra.mxu0 0.0
        %412 = vmatprep.subr.mxu0 0.0
        %413 = vmatpush1.msra.mxu0 0.0
        %414 = vmatprep.subr.mxu0 0.0
        %415 = vmatpush1.msra.mxu0 0.0
        %416 = vmatprep.subr.mxu0 0.0
        %417 = vmatpush1.msra.mxu0 0.0
        %418 = vmatprep.subr.mxu0 0.0
        %419 = vmatpush1.msra.mxu0 0.0
        %420 = vmatprep.subr.mxu0 0.0
        %421 = vmatpush1.msra.mxu0 0.0
        %422 = vmatprep.subr.mxu0 0.0
        %423 = vmatpush1.msra.mxu0 0.0
        %424 = vmatprep.subr.mxu0 0.0
        %425 = vmatpush1.msra.mxu0 0.0
        %426 = vmatprep.mubr.f32.mxu0 0.0
        %427 = vmatmul.mubr.f32.gmra.mrb[0].mxu0 %v358
        %v428 = vpop.f32.mrb[0].mxu0
        %v429 = vadd.f32 0.0, %v428
        %v430 = vpop.f32.mrb[0].mxu0
        %431 = vdwg.mxu0
        %v432 = vadd.f32 %v352, %v429
        %433 = vrot.lane.b32.xlu0 %v180, 127
        %v434 = vpop.permute.xlu0 %433
        %436 = vrot.lane.b32.xlu0 %v180, 15
        %v437 = vpop.permute.xlu0 %436
        %vm439 = vcmask 121856
        %v440 = vsel %vm439, %v434, %v437
        %s441 = scalar_lea.vmem %s1, 12
        %v442 = vld [vmem:[%s441] sm:$0xf]
        %v444 = vsel %vm201, %v442, 0
        %v447 = vsel %vm205, %v440, 0
        %449 = vmatprep.subr.mxu0 0.0
        %450 = vmatpush1.msra.mxu0 %v447
        %451 = vmatprep.subr.mxu0 0.0
        %452 = vmatpush1.msra.mxu0 0.0
        %453 = vmatprep.subr.mxu0 0.0
        %454 = vmatpush1.msra.mxu0 0.0
        %455 = vmatprep.subr.mxu0 0.0
        %456 = vmatpush1.msra.mxu0 0.0
        %457 = vmatprep.subr.mxu0 0.0
        %458 = vmatpush1.msra.mxu0 0.0
        %459 = vmatprep.subr.mxu0 0.0
        %460 = vmatpush1.msra.mxu0 0.0
        %461 = vmatprep.subr.mxu0 0.0
        %462 = vmatpush1.msra.mxu0 0.0
        %463 = vmatprep.subr.mxu0 0.0
        %464 = vmatpush1.msra.mxu0 0.0
        %465 = vmatprep.subr.mxu0 0.0
        %466 = vmatpush1.msra.mxu0 0.0
        %467 = vmatprep.subr.mxu0 0.0
        %468 = vmatpush1.msra.mxu0 0.0
        %469 = vmatprep.subr.mxu0 0.0
        %470 = vmatpush1.msra.mxu0 0.0
        %471 = vmatprep.subr.mxu0 0.0
        %472 = vmatpush1.msra.mxu0 0.0
        %473 = vmatprep.subr.mxu0 0.0
        %474 = vmatpush1.msra.mxu0 0.0
        %475 = vmatprep.subr.mxu0 0.0
        %476 = vmatpush1.msra.mxu0 0.0
        %477 = vmatprep.subr.mxu0 0.0
        %478 = vmatpush1.msra.mxu0 0.0
        %479 = vmatprep.subr.mxu0 0.0
        %480 = vmatpush1.msra.mxu0 0.0
        %481 = vmatprep.subr.mxu0 0.0
        %482 = vmatpush1.msra.mxu0 0.0
        %483 = vmatprep.subr.mxu0 0.0
        %484 = vmatpush1.msra.mxu0 0.0
        %485 = vmatprep.subr.mxu0 0.0
        %486 = vmatpush1.msra.mxu0 0.0
        %487 = vmatprep.subr.mxu0 0.0
        %488 = vmatpush1.msra.mxu0 0.0
        %489 = vmatprep.subr.mxu0 0.0
        %490 = vmatpush1.msra.mxu0 0.0
        %491 = vmatprep.subr.mxu0 0.0
        %492 = vmatpush1.msra.mxu0 0.0
        %493 = vmatprep.subr.mxu0 0.0
        %494 = vmatpush1.msra.mxu0 0.0
        %495 = vmatprep.subr.mxu0 0.0
        %496 = vmatpush1.msra.mxu0 0.0
        %497 = vmatprep.subr.mxu0 0.0
        %498 = vmatpush1.msra.mxu0 0.0
        %499 = vmatprep.subr.mxu0 0.0
        %500 = vmatpush1.msra.mxu0 0.0
        %501 = vmatprep.subr.mxu0 0.0
        %502 = vmatpush1.msra.mxu0 0.0
        %503 = vmatprep.subr.mxu0 0.0
        %504 = vmatpush1.msra.mxu0 0.0
        %505 = vmatprep.subr.mxu0 0.0
        %506 = vmatpush1.msra.mxu0 0.0
        %507 = vmatprep.subr.mxu0 0.0
        %508 = vmatpush1.msra.mxu0 0.0
        %509 = vmatprep.subr.mxu0 0.0
        %510 = vmatpush1.msra.mxu0 0.0
        %511 = vmatprep.subr.mxu0 0.0
        %512 = vmatpush1.msra.mxu0 0.0
        %513 = vmatprep.mubr.f32.mxu0 0.0
        %514 = vmatmul.mubr.f32.gmra.mrb[0].mxu0 %v444
        %v515 = vpop.f32.mrb[0].mxu0
        %v516 = vadd.f32 0.0, %v515
        %v517 = vpop.f32.mrb[0].mxu0
        %518 = vdwg.mxu0
        %v519 = vadd.f32 %v432, %v516
        %520 = vrot.lane.b32.xlu0 %v180, 126
        %v521 = vpop.permute.xlu0 %520
        %523 = vrot.lane.b32.xlu0 %v180, 14
        %v524 = vpop.permute.xlu0 %523
        %vm526 = vcmask 113664
        %v527 = vsel %vm526, %v521, %v524
        %s528 = scalar_lea.vmem %s1, 16
        %v529 = vld [vmem:[%s528] sm:$0xf]
        %v531 = vsel %vm201, %v529, 0
        %v534 = vsel %vm205, %v527, 0
        %536 = vmatprep.subr.mxu0 0.0
        %537 = vmatpush1.msra.mxu0 %v534
        %538 = vmatprep.subr.mxu0 0.0
        %539 = vmatpush1.msra.mxu0 0.0
        %540 = vmatprep.subr.mxu0 0.0
        %541 = vmatpush1.msra.mxu0 0.0
        %542 = vmatprep.subr.mxu0 0.0
        %543 = vmatpush1.msra.mxu0 0.0
        %544 = vmatprep.subr.mxu0 0.0
        %545 = vmatpush1.msra.mxu0 0.0
        %546 = vmatprep.subr.mxu0 0.0
        %547 = vmatpush1.msra.mxu0 0.0
        %548 = vmatprep.subr.mxu0 0.0
        %549 = vmatpush1.msra.mxu0 0.0
        %550 = vmatprep.subr.mxu0 0.0
        %551 = vmatpush1.msra.mxu0 0.0
        %552 = vmatprep.subr.mxu0 0.0
        %553 = vmatpush1.msra.mxu0 0.0
        %554 = vmatprep.subr.mxu0 0.0
        %555 = vmatpush1.msra.mxu0 0.0
        %556 = vmatprep.subr.mxu0 0.0
        %557 = vmatpush1.msra.mxu0 0.0
        %558 = vmatprep.subr.mxu0 0.0
        %559 = vmatpush1.msra.mxu0 0.0
        %560 = vmatprep.subr.mxu0 0.0
        %561 = vmatpush1.msra.mxu0 0.0
        %562 = vmatprep.subr.mxu0 0.0
        %563 = vmatpush1.msra.mxu0 0.0
        %564 = vmatprep.subr.mxu0 0.0
        %565 = vmatpush1.msra.mxu0 0.0
        %566 = vmatprep.subr.mxu0 0.0
        %567 = vmatpush1.msra.mxu0 0.0
        %568 = vmatprep.subr.mxu0 0.0
        %569 = vmatpush1.msra.mxu0 0.0
        %570 = vmatprep.subr.mxu0 0.0
        %571 = vmatpush1.msra.mxu0 0.0
        %572 = vmatprep.subr.mxu0 0.0
        %573 = vmatpush1.msra.mxu0 0.0
        %574 = vmatprep.subr.mxu0 0.0
        %575 = vmatpush1.msra.mxu0 0.0
        %576 = vmatprep.subr.mxu0 0.0
        %577 = vmatpush1.msra.mxu0 0.0
        %578 = vmatprep.subr.mxu0 0.0
        %579 = vmatpush1.msra.mxu0 0.0
        %580 = vmatprep.subr.mxu0 0.0
        %581 = vmatpush1.msra.mxu0 0.0
        %582 = vmatprep.subr.mxu0 0.0
        %583 = vmatpush1.msra.mxu0 0.0
        %584 = vmatprep.subr.mxu0 0.0
        %585 = vmatpush1.msra.mxu0 0.0
        %586 = vmatprep.subr.mxu0 0.0
        %587 = vmatpush1.msra.mxu0 0.0
        %588 = vmatprep.subr.mxu0 0.0
        %589 = vmatpush1.msra.mxu0 0.0
        %590 = vmatprep.subr.mxu0 0.0
        %591 = vmatpush1.msra.mxu0 0.0
        %592 = vmatprep.subr.mxu0 0.0
        %593 = vmatpush1.msra.mxu0 0.0
        %594 = vmatprep.subr.mxu0 0.0
        %595 = vmatpush1.msra.mxu0 0.0
        %596 = vmatprep.subr.mxu0 0.0
        %597 = vmatpush1.msra.mxu0 0.0
        %598 = vmatprep.subr.mxu0 0.0
        %599 = vmatpush1.msra.mxu0 0.0
        %600 = vmatprep.mubr.f32.mxu0 0.0
        %601 = vmatmul.mubr.f32.gmra.mrb[0].mxu0 %v531
        %v602 = vpop.f32.mrb[0].mxu0
        %v603 = vadd.f32 0.0, %v602
        %v604 = vpop.f32.mrb[0].mxu0
        %605 = vdwg.mxu0
        %v606 = vadd.f32 %v519, %v603
        %v607 = vld [vmem:[%s2] sm:$0xf]
        %609 = vset.pattern.permute.xlu0 0
        %610 = vperm.xlu0 %609, %v607
        %v611 = vpop.permute.xlu0 %610
        %v613 = vadd.f32 %v606, %v611
        %vm614 = vcmask 125952
        %615 = vst.msk [vmem:[%s175] sm:$0xf] %vm614, %v613
        %s616 = sand.u32 %s107, 1
        %s617 = scalar_lea.sflag [#allocation3], %s616
        %s618 = sand.u32 %s107, 1
        %s619 = smul.addr %s618, 4
        %s620 = scalar_lea.vmem [#allocation2], %s619
        // Predicated region
        $region33: #{circ_conv.1} parent=31 // pred_check
          %p621 = pneg %p117
        $region34: #{circ_conv.1} parent=31 // pred_check_branch
          %623 = sbr.rel (%p621) target = $region36
        $region35: #{circ_conv.1} parent=31 // pred_region
          %s625 = ssub.s32 64, 64
          %626 = vsyncadd %s617, %s625
          %s627 = sadd.s32 %s22, %s21
          %s628 = smul.addr %s627, 64
          %s629 = scalar_lea.hbm %s3, %s628
          %s631 = sshll.u32 %s620, 4
          %s632 = int_to_ptr.vmem [resolvable:$true] %s631
          %634 = dma.vmem_to_hbm [thread:$0]  %s632, 64, %s629, %s617
        $region36: #{circ_conv.1} parent=31 // pred_fallthru
          _
      $region32: #{circ_conv.1} parent=5 // pred_fallthru
        _
      %p635 = scmp.le.s32.totalorder 2, %s12
      // Predicated region
      $region37: #{circ_conv.1} parent=5 // pred_check
        %p636 = pneg %p635
      $region38: #{circ_conv.1} parent=5 // pred_check_branch
        %638 = sbr.rel (%p636) target = $region40
      $region39: #{circ_conv.1} parent=5 // pred_region
        %s639 = ssub.s32 %s12, 2
        // Predicated region
        $region41: #{circ_conv.1} parent=39 // pred_check
          %p640 = pneg %p123
        $region42: #{circ_conv.1} parent=39 // pred_check_branch
          %642 = sbr.rel (%p640) target = $region44
        $region43: #{circ_conv.1} parent=39 // pred_region
          %s643 = sand.u32 %s108, 1
          %s644 = scalar_lea.sflag [#allocation3], %s643
          %s645 = sand.u32 %s108, 1
          %s646 = smul.addr %s645, 4
          %s647 = scalar_lea.vmem [#allocation2], %s646
          %648 = dma.done %s644, 64
        $region44: #{circ_conv.1} parent=39 // pred_fallthru
          _
      $region40: #{circ_conv.1} parent=5 // pred_fallthru
        _
    $region6: #{circ_conv.1} parent=1 // loop_footer
      %s16 = sadd.s32 1, %s12
    $region7: #{circ_conv.1} parent=1 // loop_footer_branch
      %11 = sbr.rel target = $region3
    $region8: #{circ_conv.1} parent=1 // loop_exit
      _
    %649 = vsyncpa [#allocation3], 1
    %s650 = scalar_lea.sflag [#allocation3], 1
    %651 = vsyncpa %s650, 1

</llo_original>
